<compile_context>
chip_gen: v7x
topology: tpu7x:2x2x1
jax: 0.10.0
libtpu: 0.0.40
codegen_flags: <defaults>
</compile_context>

<pallas_src>
import functools

import jax
import jax.numpy as jnp
from jax.experimental import pallas as pl
from jax.experimental.pallas import tpu as pltpu


def _mat_gru_cell_kernel(q_ref, w_ref, b_ref, out_ref, q_scratch, *, rows):
    R = rows
    t = pl.program_id(0)

    # Load the initial state once; carry it across grid steps in VMEM scratch.
    @pl.when(t == 0)
    def _():
        q_scratch[...] = q_ref[...].astype(jnp.float32)

    q = q_scratch[...]                                  # (R, C) f32 carried state
    q_bf = q.astype(jnp.bfloat16)

    # ONE MXU matmul for all five W/U terms that multiply q (z_topk == prev_Q).
    wu_stack = w_ref[0:5 * R, :]                        # [Wu;Wr;Wh;Uu;Ur]  bf16
    wz = jnp.dot(wu_stack, q_bf,
                 preferred_element_type=jnp.float32)    # (5R, C) f32

    b = b_ref[...]                                      # [bu;br;bh] (3R, C) f32

    update = jax.nn.sigmoid(wz[0:R]         + wz[3 * R:4 * R] + b[0:R])
    reset  = jax.nn.sigmoid(wz[R:2 * R]     + wz[4 * R:5 * R] + b[R:2 * R])

    # Second (and last) MXU matmul: Uh . (reset * q).
    h_in = (reset * q).astype(jnp.bfloat16)
    uh = w_ref[5 * R:6 * R, :]                          # Uh (R, R) bf16
    h_cap = jnp.tanh(wz[2 * R:3 * R]
                     + jnp.dot(uh, h_in, preferred_element_type=jnp.float32)
                     + b[2 * R:3 * R])

    new_q = (1.0 - update) * q + update * h_cap
    q_scratch[...] = new_q

    # Output block index is constant across the grid -> HBM writeback happens
    # once, after the last step.
    @pl.when(t == pl.num_programs(0) - 1)
    def _():
        out_ref[...] = new_q.astype(out_ref.dtype)


def pack_params(p):
    """One-time packing (outside the kernel).
    w_packed row layout: [0,5R) = [Wu;Wr;Wh;Uu;Ur] (all multiply q), [5R,6R) = Uh.
    b_packed row layout: [0,3R) = [bu;br;bh]."""
    w = jnp.concatenate([p["Wu"], p["Wr"], p["Wh"], p["Uu"], p["Ur"], p["Uh"]],
                        axis=0).astype(jnp.bfloat16)
    b = jnp.concatenate([p["bu"], p["br"], p["bh"]], axis=0).astype(jnp.float32)
    return w, b


def _padded_bytes(arr):
    """HBM bytes of a 2-D array in its (sublane, 128)-tiled layout."""
    sub = 16 if arr.dtype == jnp.bfloat16 else 8
    r = ((arr.shape[0] + sub - 1) // sub) * sub
    c = ((arr.shape[1] + 127) // 128) * 128
    return r * c * arr.dtype.itemsize


def mat_gru_cell(prev_Q, w_packed, b_packed, *, num_steps=1, donate_prev_q=False):
    """Apply the mat_GRU_cell `num_steps` times (num_steps=1 == module forward)."""
    rows, cols = prev_Q.shape
    if rows % 16 != 0:
        # bf16 packs 2 rows/sublane; static slices at 5R need 16-row alignment.
        raise ValueError("rows must be a multiple of 16 for the packed bf16 "
                         "weight buffer slices")
    assert w_packed.shape == (6 * rows, rows) and w_packed.dtype == jnp.bfloat16
    assert b_packed.shape == (3 * rows, cols)

    flops_step = 2 * (5 * rows * rows * cols    # merged [W;U] stack . q
                      + rows * rows * cols      # Uh . (reset*q)
                      ) + 10 * rows * cols      # gating elementwise
    cost = pl.CostEstimate(
        flops=flops_step * num_steps,
        transcendentals=3 * rows * cols * num_steps,
        bytes_accessed=int(2 * _padded_bytes(prev_Q)       # q in + Q out
                           + _padded_bytes(w_packed)
                           + _padded_bytes(b_packed)))

    return pl.pallas_call(
        functools.partial(_mat_gru_cell_kernel, rows=rows),
        out_shape=jax.ShapeDtypeStruct((rows, cols), prev_Q.dtype),
        grid=(num_steps,),
        in_specs=[pl.BlockSpec((rows, cols), lambda t: (0, 0)),
                  pl.BlockSpec((6 * rows, rows), lambda t: (0, 0)),
                  pl.BlockSpec((3 * rows, cols), lambda t: (0, 0))],
        out_specs=pl.BlockSpec((rows, cols), lambda t: (0, 0)),
        scratch_shapes=[pltpu.VMEM((rows, cols), jnp.float32)],
        compiler_params=pltpu.CompilerParams(
            dimension_semantics=("arbitrary",)),      # sequential recurrence
        cost_estimate=cost,
        input_output_aliases={0: 0} if donate_prev_q else {},
    )(prev_Q, w_packed, b_packed)


def init_params(key, rows, cols):
    """Mirrors mat_GRU_gate.reset_param:
    W, U ~ Uniform(-1/sqrt(rows), 1/sqrt(rows)); bias = zeros(rows, cols)."""
    stdv = 1.0 / (rows ** 0.5)
    keys = jax.random.split(key, 6)
    u = lambda k: jax.random.uniform(k, (rows, rows), jnp.float32, -stdv, stdv)
    return {
        "Wu": u(keys[0]), "Uu": u(keys[1]), "bu": jnp.zeros((rows, cols), jnp.float32),
        "Wr": u(keys[2]), "Ur": u(keys[3]), "br": jnp.zeros((rows, cols), jnp.float32),
        "Wh": u(keys[4]), "Uh": u(keys[5]), "bh": jnp.zeros((rows, cols), jnp.float32),
    }


def mat_gru_cell_ref(prev_Q, p):
    """Pure-f32 reference (exactly the PyTorch module math)."""
    z = prev_Q
    update = jax.nn.sigmoid(p["Wu"] @ z + p["Uu"] @ prev_Q + p["bu"])
    reset = jax.nn.sigmoid(p["Wr"] @ z + p["Ur"] @ prev_Q + p["br"])
    h_cap = jnp.tanh(p["Wh"] @ z + p["Uh"] @ (reset * prev_Q) + p["bh"])
    return (1.0 - update) * prev_Q + update * h_cap


def mat_gru_cell_ref_bf16(prev_Q, p):
    """Same math with bf16 matmul operands / f32 accumulation (what the kernel
    does on the MXU) — used to check the fused recurrence tightly."""
    bf = lambda x: x.astype(jnp.bfloat16)
    d = lambda a, b: jnp.dot(bf(a), bf(b), preferred_element_type=jnp.float32)
    z = prev_Q
    update = jax.nn.sigmoid(d(p["Wu"], z) + d(p["Uu"], prev_Q) + p["bu"])
    reset = jax.nn.sigmoid(d(p["Wr"], z) + d(p["Ur"], prev_Q) + p["br"])
    h_cap = jnp.tanh(d(p["Wh"], z) + d(p["Uh"], reset * prev_Q) + p["bh"])
    return (1.0 - update) * prev_Q + update * h_cap


if __name__ == "__main__":
    rows, cols = 32, 16  # args.rows, args.cols
    key = jax.random.PRNGKey(0)
    kq, kp = jax.random.split(key)

    prev_Q = jax.random.normal(kq, (rows, cols), jnp.float32)
    params = init_params(kp, rows, cols)
    w_packed, b_packed = pack_params(params)   # one-time packing, outside kernel

    # --- single step == original module forward ---
    new_Q = mat_gru_cell(prev_Q, w_packed, b_packed)
    jax.block_until_ready(new_Q)

    ref_f32 = mat_gru_cell_ref(prev_Q, params)
    # bf16 MXU operands vs pure-f32 reference -> relaxed tolerance.
    assert jnp.allclose(new_Q, ref_f32, atol=5e-2, rtol=5e-2), \
        "single-step mismatch vs f32 reference"
    # Against a bf16-operand reference the kernel is tight.
    ref_bf = mat_gru_cell_ref_bf16(prev_Q, params)
    assert jnp.allclose(new_Q, ref_bf, atol=2e-3, rtol=2e-3), \
        "single-step mismatch vs bf16-operand reference"

    # --- fused T-step recurrence (params DMA'd once, Q carried in VMEM) ---
    T = 4
    out_T = mat_gru_cell(prev_Q, w_packed, b_packed, num_steps=T)
    jax.block_until_ready(out_T)
    ref_T = prev_Q
    for _ in range(T):
        ref_T = mat_gru_cell_ref_bf16(ref_T, params)
    assert jnp.allclose(out_T, ref_T, atol=5e-3, rtol=5e-3), \
        "fused multi-step recurrence mismatch"

    print("KERNEL_OK")
</pallas_src>

<mosaic_0001>
module attributes {stable_mosaic.version = 11 : i64} {
  func.func @_mat_gru_cell_kernel(%arg0: i32, %arg1: memref<32x16xf32, #tpu.memory_space<vmem>>, %arg2: memref<192x32xbf16, #tpu.memory_space<vmem>>, %arg3: memref<96x16xf32, #tpu.memory_space<vmem>>, %arg4: memref<32x16xf32, #tpu.memory_space<vmem>>, %arg5: memref<32x16xf32, #tpu.memory_space<vmem>>) attributes {dimension_semantics = [#tpu.dimension_semantics<arbitrary>], iteration_bounds = array<i64: 1>, scalar_prefetch = 0 : i64, scratch_operands = 1 : i64, tpu.core_type = #tpu.core_type<tc>, window_params = [{pipeline_mode = #tpu.pipeline_mode<synchronous>, transform_indices = @transform_0, window_bounds = array<i64: 32, 16>}, {pipeline_mode = #tpu.pipeline_mode<synchronous>, transform_indices = @transform_1, window_bounds = array<i64: 192, 32>}, {pipeline_mode = #tpu.pipeline_mode<synchronous>, transform_indices = @transform_2, window_bounds = array<i64: 96, 16>}, {pipeline_mode = #tpu.pipeline_mode<synchronous>, transform_indices = @transform_3, window_bounds = array<i64: 32, 16>}]} {
    %c0_i32 = arith.constant 0 : i32
    %0 = arith.cmpi eq, %arg0, %c0_i32 : i32
    %1 = arith.extui %0 : i1 to i32
    %c0_i32_0 = arith.constant 0 : i32
    %2 = arith.cmpi ne, %1, %c0_i32_0 : i32
    scf.if %2 {
      %c0_15 = arith.constant 0 : index
      %c0_16 = arith.constant 0 : index
      %46 = vector.load %arg1[%c0_15, %c0_16] : memref<32x16xf32, #tpu.memory_space<vmem>>, vector<32x16xf32>
      %c0_17 = arith.constant 0 : index
      %c0_18 = arith.constant 0 : index
      %47 = vector.load %arg5[%c0_17, %c0_18] : memref<32x16xf32, #tpu.memory_space<vmem>>, vector<32x16xf32>
      tpu.vector_store %arg5[%c0_17, %c0_18], %46 {strides = array<i32>} : memref<32x16xf32, #tpu.memory_space<vmem>>, vector<32x16xf32>,
    } else {
    }
    %c0 = arith.constant 0 : index
    %c0_1 = arith.constant 0 : index
    %3 = vector.load %arg5[%c0, %c0_1] : memref<32x16xf32, #tpu.memory_space<vmem>>, vector<32x16xf32>
    %4 = arith.truncf %3 : vector<32x16xf32> to vector<32x16xbf16>
    %c0_2 = arith.constant 0 : index
    %c0_3 = arith.constant 0 : index
    %5 = vector.load %arg2[%c0_2, %c0_3] : memref<192x32xbf16, #tpu.memory_space<vmem>>, vector<160x32xbf16>
    %cst = arith.constant dense<0.000000e+00> : vector<160x16xf32>
    %6 = tpu.matmul %5, %4, %cst {dimension_numbers = #tpu.dot_dimension_numbers<[1], [0], [0], [1], [0, 0, 1, 1], [], []>} : vector<160x32xbf16>, vector<32x16xbf16>, vector<160x16xf32> -> vector<160x16xf32>
    %c0_4 = arith.constant 0 : index
    %c0_5 = arith.constant 0 : index
    %7 = vector.load %arg3[%c0_4, %c0_5] : memref<96x16xf32, #tpu.memory_space<vmem>>, vector<96x16xf32>
    %8 = vector.extract_strided_slice %6 {offsets = [0, 0], sizes = [32, 16], strides = [1, 1]} : vector<160x16xf32> to vector<32x16xf32>
    %9 = vector.extract_strided_slice %6 {offsets = [96, 0], sizes = [32, 16], strides = [1, 1]} : vector<160x16xf32> to vector<32x16xf32>
    %10 = arith.addf %8, %9 : vector<32x16xf32>
    %11 = vector.extract_strided_slice %7 {offsets = [0, 0], sizes = [32, 16], strides = [1, 1]} : vector<96x16xf32> to vector<32x16xf32>
    %12 = arith.addf %10, %11 : vector<32x16xf32>
    %13 = arith.negf %12 : vector<32x16xf32>
    %14 = math.exp %13 : vector<32x16xf32>
    %cst_6 = arith.constant 1.000000e+00 : f32
    %15 = vector.broadcast %cst_6 : f32 to vector<32x16xf32>
    %16 = arith.addf %15, %14 : vector<32x16xf32>
    %17 = arith.divf %15, %16 : vector<32x16xf32>
    %18 = vector.extract_strided_slice %6 {offsets = [32, 0], sizes = [32, 16], strides = [1, 1]} : vector<160x16xf32> to vector<32x16xf32>
    %19 = vector.extract_strided_slice %6 {offsets = [128, 0], sizes = [32, 16], strides = [1, 1]} : vector<160x16xf32> to vector<32x16xf32>
    %20 = arith.addf %18, %19 : vector<32x16xf32>
    %21 = vector.extract_strided_slice %7 {offsets = [32, 0], sizes = [32, 16], strides = [1, 1]} : vector<96x16xf32> to vector<32x16xf32>
    %22 = arith.addf %20, %21 : vector<32x16xf32>
    %23 = arith.negf %22 : vector<32x16xf32>
    %24 = math.exp %23 : vector<32x16xf32>
    %cst_7 = arith.constant 1.000000e+00 : f32
    %25 = vector.broadcast %cst_7 : f32 to vector<32x16xf32>
    %26 = arith.addf %25, %24 : vector<32x16xf32>
    %27 = arith.divf %25, %26 : vector<32x16xf32>
    %28 = arith.mulf %27, %3 : vector<32x16xf32>
    %29 = arith.truncf %28 : vector<32x16xf32> to vector<32x16xbf16>
    %c160 = arith.constant 160 : index
    %c0_8 = arith.constant 0 : index
    %30 = vector.load %arg2[%c160, %c0_8] : memref<192x32xbf16, #tpu.memory_space<vmem>>, vector<32x32xbf16>
    %31 = vector.extract_strided_slice %6 {offsets = [64, 0], sizes = [32, 16], strides = [1, 1]} : vector<160x16xf32> to vector<32x16xf32>
    %cst_9 = arith.constant dense<0.000000e+00> : vector<32x16xf32>
    %32 = tpu.matmul %30, %29, %cst_9 {dimension_numbers = #tpu.dot_dimension_numbers<[1], [0], [0], [1], [0, 0, 1, 1], [], []>} : vector<32x32xbf16>, vector<32x16xbf16>, vector<32x16xf32> -> vector<32x16xf32>
    %33 = arith.addf %31, %32 : vector<32x16xf32>
    %34 = vector.extract_strided_slice %7 {offsets = [64, 0], sizes = [32, 16], strides = [1, 1]} : vector<96x16xf32> to vector<32x16xf32>
    %35 = arith.addf %33, %34 : vector<32x16xf32>
    %36 = math.tanh %35 : vector<32x16xf32>
    %cst_10 = arith.constant 1.000000e+00 : f32
    %37 = vector.broadcast %cst_10 : f32 to vector<32x16xf32>
    %38 = arith.subf %37, %17 : vector<32x16xf32>
    %39 = arith.mulf %38, %3 : vector<32x16xf32>
    %40 = arith.mulf %17, %36 : vector<32x16xf32>
    %41 = arith.addf %39, %40 : vector<32x16xf32>
    %c0_11 = arith.constant 0 : index
    %c0_12 = arith.constant 0 : index
    %42 = vector.load %arg5[%c0_11, %c0_12] : memref<32x16xf32, #tpu.memory_space<vmem>>, vector<32x16xf32>
    tpu.vector_store %arg5[%c0_11, %c0_12], %41 {strides = array<i32>} : memref<32x16xf32, #tpu.memory_space<vmem>>, vector<32x16xf32>,
    %c0_i32_13 = arith.constant 0 : i32
    %43 = arith.cmpi eq, %arg0, %c0_i32_13 : i32
    %44 = arith.extui %43 : i1 to i32
    %c0_i32_14 = arith.constant 0 : i32
    %45 = arith.cmpi ne, %44, %c0_i32_14 : i32
    scf.if %45 {
      %c0_15 = arith.constant 0 : index
      %c0_16 = arith.constant 0 : index
      %46 = vector.load %arg4[%c0_15, %c0_16] : memref<32x16xf32, #tpu.memory_space<vmem>>, vector<32x16xf32>
      tpu.vector_store %arg4[%c0_15, %c0_16], %41 {strides = array<i32>} : memref<32x16xf32, #tpu.memory_space<vmem>>, vector<32x16xf32>,
    } else {
    }
    return
  }
  func.func @transform_0(%arg0: i32) -> (i32, i32) {
    %c0_i32 = arith.constant 0 : i32
    %c0_i32_0 = arith.constant 0 : i32
    %c0_i32_1 = arith.constant 0 : i32
    return %c0_i32, %c0_i32_0 : i32, i32
  }
  func.func @transform_1(%arg0: i32) -> (i32, i32) {
    %c0_i32 = arith.constant 0 : i32
    %c0_i32_0 = arith.constant 0 : i32
    %c0_i32_1 = arith.constant 0 : i32
    return %c0_i32, %c0_i32_0 : i32, i32
  }
  func.func @transform_2(%arg0: i32) -> (i32, i32) {
    %c0_i32 = arith.constant 0 : i32
    %c0_i32_0 = arith.constant 0 : i32
    %c0_i32_1 = arith.constant 0 : i32
    return %c0_i32, %c0_i32_0 : i32, i32
  }
  func.func @transform_3(%arg0: i32) -> (i32, i32) {
    %c0_i32 = arith.constant 0 : i32
    %c0_i32_0 = arith.constant 0 : i32
    %c0_i32_1 = arith.constant 0 : i32
    return %c0_i32, %c0_i32_0 : i32, i32
  }
}

</mosaic_0001>

<llo_original>
// kernel: tpu_custom_call.1
$region0: #{tpu_custom_call.1}
  #allocation0 [shape = 'u32[]', space=smem, size = 0x4, offset = 0x4, fixed_abs, tag = 'smem constant byte address 0x4 - core index']
  #allocation1 [shape = 'u32[144,128]{1,0:T(1,128)}', space=vmem, size = 0x12000, scoped, tag = 'internal scratch']
  #allocation2 [shape = 'f32[32,16]{1,0:T(8,128)}', space=vmem, size = 0x4000, scoped, tag = 'scratch operand']
  %s0 = inlined_call_operand.vmem [shape: f32[32,16], index: 0, kind: input, shape index: {}]
  %s1 = inlined_call_operand.vmem [shape: bf16[192,32], index: 1, kind: input, shape index: {}]
  %s2 = inlined_call_operand.vmem [shape: f32[96,16], index: 2, kind: input, shape index: {}]
  %s3 = inlined_call_operand.vmem [shape: f32[32,16], index: 3, kind: output, shape index: {}]
  %s4 = sld [smem:[#allocation0]]
  $region30: #{tpu_custom_call.1} parent=0
    _
  %s6 = ssub.s32 1, %s4
  %s7 = scalar_select 0, %s6, %s4
  // Predicated region
  $region2: #{tpu_custom_call.1} parent=0 // pred_check
    _
  $region3: #{tpu_custom_call.1} parent=0 // pred_check_branch
    %9 = sbr.rel (0) target = $region5
  $region4: #{tpu_custom_call.1} parent=0 // pred_region
    _
  $region5: #{tpu_custom_call.1} parent=0 // pred_fallthru
    _
  // Predicated region
  $region6: #{tpu_custom_call.1} parent=0 // pred_check
    _
  $region7: #{tpu_custom_call.1} parent=0 // pred_check_branch
    %11 = sbr.rel (0) target = $region9
  $region8: #{tpu_custom_call.1} parent=0 // pred_region
    _
  $region9: #{tpu_custom_call.1} parent=0 // pred_fallthru
    _
  // Predicated region
  $region10: #{tpu_custom_call.1} parent=0 // pred_check
    _
  $region11: #{tpu_custom_call.1} parent=0 // pred_check_branch
    %13 = sbr.rel (0) target = $region13
  $region12: #{tpu_custom_call.1} parent=0 // pred_region
    _
  $region13: #{tpu_custom_call.1} parent=0 // pred_fallthru
    _
  %p15 = scmp.eq.s32.totalorder 0, 0
  // Predicated region
  $region14: #{tpu_custom_call.1} parent=0 // pred_check
    %p16 = pneg %p15
  $region15: #{tpu_custom_call.1} parent=0 // pred_check_branch
    %18 = sbr.rel (%p16) target = $region17
  $region16: #{tpu_custom_call.1} parent=0 // pred_region
    %v19 = vld [vmem:[%s0] sm:$0xff]
    %v20 = vld [vmem:[%s0 + $0x8] sm:$0xff]
    %v21 = vld [vmem:[%s0 + $0x10] sm:$0xff]
    %v22 = vld [vmem:[%s0 + $0x18] sm:$0xff]
    %vm23 = vcmask 130048
    %24 = vst.msk [vmem:[#allocation2] sm:$0xff] %vm23, %v19
    %25 = vst.msk [vmem:[#allocation2 + $0x8] sm:$0xff] %vm23, %v20
    %26 = vst.msk [vmem:[#allocation2 + $0x10] sm:$0xff] %vm23, %v21
    %27 = vst.msk [vmem:[#allocation2 + $0x18] sm:$0xff] %vm23, %v22
  $region17: #{tpu_custom_call.1} parent=0 // pred_fallthru
    _
  %v28 = vld [vmem:[#allocation2] sm:$0xff]
  %v29 = vld [vmem:[#allocation2 + $0x8] sm:$0xff]
  %v30 = vld [vmem:[#allocation2 + $0x10] sm:$0xff]
  %v31 = vld [vmem:[#allocation2 + $0x18] sm:$0xff]
  %v32 = vpack.c.bf16 %v29, %v28
  %v33 = vpack.c.bf16 %v31, %v30
  %v34 = vld [vmem:[%s1] sm:$0xf]
  %v35 = vld [vmem:[%s1 + $0x4] sm:$0xf]
  %v36 = vld [vmem:[%s1 + $0x8] sm:$0xf]
  %v37 = vld [vmem:[%s1 + $0xc] sm:$0xf]
  %v38 = vld [vmem:[%s1 + $0x10] sm:$0xf]
  %v39 = vld [vmem:[%s1 + $0x14] sm:$0xf]
  %v40 = vld [vmem:[%s1 + $0x18] sm:$0xf]
  %v41 = vld [vmem:[%s1 + $0x1c] sm:$0xf]
  %v42 = vld [vmem:[%s1 + $0x20] sm:$0xf]
  %v43 = vld [vmem:[%s1 + $0x24] sm:$0xf]
  %v44 = vld [vmem:[%s1 + $0x28] sm:$0xf]
  %v45 = vld [vmem:[%s1 + $0x2c] sm:$0xf]
  %v46 = vld [vmem:[%s1 + $0x30] sm:$0xf]
  %v47 = vld [vmem:[%s1 + $0x34] sm:$0xf]
  %v48 = vld [vmem:[%s1 + $0x38] sm:$0xf]
  %v49 = vld [vmem:[%s1 + $0x3c] sm:$0xf]
  %v50 = vld [vmem:[%s1 + $0x40] sm:$0xf]
  %v51 = vld [vmem:[%s1 + $0x44] sm:$0xf]
  %v52 = vld [vmem:[%s1 + $0x48] sm:$0xf]
  %v53 = vld [vmem:[%s1 + $0x4c] sm:$0xf]
  %v74 = vunpack.c.l.b16 %v34
  %v75 = vunpack.c.l.b16 %v35
  %v76 = vunpack.c.l.b16 %v36
  %v77 = vunpack.c.l.b16 %v37
  %v78 = vunpack.c.l.b16 %v38
  %v79 = vunpack.c.l.b16 %v39
  %v80 = vunpack.c.l.b16 %v40
  %v81 = vunpack.c.l.b16 %v41
  %v82 = vunpack.c.l.b16 %v42
  %v83 = vunpack.c.l.b16 %v43
  %v84 = vunpack.c.l.b16 %v44
  %v85 = vunpack.c.l.b16 %v45
  %v86 = vunpack.c.l.b16 %v46
  %v87 = vunpack.c.l.b16 %v47
  %v88 = vunpack.c.l.b16 %v48
  %v89 = vunpack.c.l.b16 %v49
  %v90 = vunpack.c.l.b16 %v50
  %v91 = vunpack.c.l.b16 %v51
  %v92 = vunpack.c.l.b16 %v52
  %v93 = vunpack.c.l.b16 %v53
  %v94 = vpack.c.b16 %v75, %v74
  %v95 = vpack.c.b16 %v77, %v76
  %v96 = vpack.c.b16 %v79, %v78
  %v97 = vpack.c.b16 %v81, %v80
  %v98 = vpack.c.b16 %v83, %v82
  %v99 = vpack.c.b16 %v85, %v84
  %v100 = vpack.c.b16 %v87, %v86
  %v101 = vpack.c.b16 %v89, %v88
  %v102 = vpack.c.b16 %v91, %v90
  %v103 = vpack.c.b16 %v93, %v92
  %vm104 = vcmask 261120
  %v106 = vsel %vm104, %v94, 0
  %v109 = vsel %vm104, %v95, 0
  %v112 = vsel %vm104, %v96, 0
  %v115 = vsel %vm104, %v97, 0
  %v118 = vsel %vm104, %v98, 0
  %v121 = vsel %vm104, %v99, 0
  %v124 = vsel %vm104, %v100, 0
  %v127 = vsel %vm104, %v101, 0
  %v130 = vsel %vm104, %v102, 0
  %v133 = vsel %vm104, %v103, 0
  %135 = vmatprep.subr.bf16.mxu0 0
  %136 = vmatpush1.bf16.msra.mxu0 %v32
  %137 = vmatprep.subr.bf16.mxu0 0
  %138 = vmatpush1.bf16.msra.mxu0 %v33
  %139 = vmatprep.subr.bf16.mxu0 0
  %140 = vmatpush1.bf16.msra.mxu0 0
  %141 = vmatprep.subr.bf16.mxu0 0
  %142 = vmatpush1.bf16.msra.mxu0 0
  %143 = vmatprep.subr.bf16.mxu0 0
  %144 = vmatpush1.bf16.msra.mxu0 0
  %145 = vmatprep.subr.bf16.mxu0 0
  %146 = vmatpush1.bf16.msra.mxu0 0
  %147 = vmatprep.subr.bf16.mxu0 0
  %148 = vmatpush1.bf16.msra.mxu0 0
  %149 = vmatprep.subr.bf16.mxu0 0
  %150 = vmatpush1.bf16.msra.mxu0 0
  %151 = vmatprep.subr.bf16.mxu0 0
  %152 = vmatpush1.bf16.msra.mxu0 0
  %153 = vmatprep.subr.bf16.mxu0 0
  %154 = vmatpush1.bf16.msra.mxu0 0
  %155 = vmatprep.subr.bf16.mxu0 0
  %156 = vmatpush1.bf16.msra.mxu0 0
  %157 = vmatprep.subr.bf16.mxu0 0
  %158 = vmatpush1.bf16.msra.mxu0 0
  %159 = vmatprep.subr.bf16.mxu0 0
  %160 = vmatpush1.bf16.msra.mxu0 0
  %161 = vmatprep.subr.bf16.mxu0 0
  %162 = vmatpush1.bf16.msra.mxu0 0
  %163 = vmatprep.subr.bf16.mxu0 0
  %164 = vmatpush1.bf16.msra.mxu0 0
  %165 = vmatprep.subr.bf16.mxu0 0
  %166 = vmatpush1.bf16.msra.mxu0 0
  %167 = vmatprep.mubr.bf16.mxu0 0
  %168 = vmatmul.mubr.bf16.gmra.mrb[0].mxu0 %v106
  %v169 = vpop.f32.mrb[0].mxu0
  %v170 = vadd.f32 0.0, %v169
  %v171 = vpop.f32.mrb[0].mxu0
  %v172 = vpop.f32.mrb[0].mxu0
  %v173 = vadd.f32 0.0, %v172
  %v174 = vpop.f32.mrb[0].mxu0
  %175 = vmatprep.mubr.bf16.mxu0 0
  %176 = vmatmul.mubr.bf16.gmra.mrb[0].mxu0 %v109
  %v177 = vpop.f32.mrb[0].mxu0
  %v178 = vadd.f32 0.0, %v177
  %v179 = vpop.f32.mrb[0].mxu0
  %v180 = vpop.f32.mrb[0].mxu0
  %v181 = vadd.f32 0.0, %v180
  %v182 = vpop.f32.mrb[0].mxu0
  %183 = vmatprep.mubr.bf16.mxu0 0
  %184 = vmatmul.mubr.bf16.gmra.mrb[0].mxu0 %v112
  %v185 = vpop.f32.mrb[0].mxu0
  %v186 = vadd.f32 0.0, %v185
  %v187 = vpop.f32.mrb[0].mxu0
  %v188 = vpop.f32.mrb[0].mxu0
  %v189 = vadd.f32 0.0, %v188
  %v190 = vpop.f32.mrb[0].mxu0
  %191 = vmatprep.mubr.bf16.mxu0 0
  %192 = vmatmul.mubr.bf16.gmra.mrb[0].mxu0 %v115
  %v193 = vpop.f32.mrb[0].mxu0
  %v194 = vadd.f32 0.0, %v193
  %v195 = vpop.f32.mrb[0].mxu0
  %v196 = vpop.f32.mrb[0].mxu0
  %v197 = vadd.f32 0.0, %v196
  %v198 = vpop.f32.mrb[0].mxu0
  %199 = vmatprep.mubr.bf16.mxu0 0
  %200 = vmatmul.mubr.bf16.gmra.mrb[0].mxu0 %v118
  %v201 = vpop.f32.mrb[0].mxu0
  %v202 = vadd.f32 0.0, %v201
  %v203 = vpop.f32.mrb[0].mxu0
  %v204 = vpop.f32.mrb[0].mxu0
  %v205 = vadd.f32 0.0, %v204
  %v206 = vpop.f32.mrb[0].mxu0
  %207 = vmatprep.mubr.bf16.mxu0 0
  %208 = vmatmul.mubr.bf16.gmra.mrb[0].mxu0 %v121
  %v209 = vpop.f32.mrb[0].mxu0
  %v210 = vadd.f32 0.0, %v209
  %v211 = vpop.f32.mrb[0].mxu0
  %v212 = vpop.f32.mrb[0].mxu0
  %v213 = vadd.f32 0.0, %v212
  %v214 = vpop.f32.mrb[0].mxu0
  %215 = vmatprep.mubr.bf16.mxu0 0
  %216 = vmatmul.mubr.bf16.gmra.mrb[0].mxu0 %v124
  %v217 = vpop.f32.mrb[0].mxu0
  %v218 = vadd.f32 0.0, %v217
  %v219 = vpop.f32.mrb[0].mxu0
  %v220 = vpop.f32.mrb[0].mxu0
  %v221 = vadd.f32 0.0, %v220
  %v222 = vpop.f32.mrb[0].mxu0
  %223 = vmatprep.mubr.bf16.mxu0 0
  %224 = vmatmul.mubr.bf16.gmra.mrb[0].mxu0 %v127
  %v225 = vpop.f32.mrb[0].mxu0
  %v226 = vadd.f32 0.0, %v225
  %v227 = vpop.f32.mrb[0].mxu0
  %v228 = vpop.f32.mrb[0].mxu0
  %v229 = vadd.f32 0.0, %v228
  %v230 = vpop.f32.mrb[0].mxu0
  %231 = vmatprep.mubr.bf16.mxu0 0
  %232 = vmatmul.mubr.bf16.gmra.mrb[0].mxu0 %v130
  %v233 = vpop.f32.mrb[0].mxu0
  %v234 = vadd.f32 0.0, %v233
  %v235 = vpop.f32.mrb[0].mxu0
  %v236 = vpop.f32.mrb[0].mxu0
  %v237 = vadd.f32 0.0, %v236
  %v238 = vpop.f32.mrb[0].mxu0
  %239 = vmatprep.mubr.bf16.mxu0 0
  %240 = vmatmul.mubr.bf16.gmra.mrb[0].mxu0 %v133
  %v241 = vpop.f32.mrb[0].mxu0
  %v242 = vadd.f32 0.0, %v241
  %v243 = vpop.f32.mrb[0].mxu0
  %v244 = vpop.f32.mrb[0].mxu0
  %v245 = vadd.f32 0.0, %v244
  %v246 = vpop.f32.mrb[0].mxu0
  %247 = vdwg.mxu0
  %v248 = vld [vmem:[%s2] sm:$0xff]
  %v249 = vld [vmem:[%s2 + $0x8] sm:$0xff]
  %v250 = vld [vmem:[%s2 + $0x10] sm:$0xff]
  %v251 = vld [vmem:[%s2 + $0x18] sm:$0xff]
  %v252 = vld [vmem:[%s2 + $0x20] sm:$0xff]
  %v253 = vld [vmem:[%s2 + $0x28] sm:$0xff]
  %v254 = vld [vmem:[%s2 + $0x30] sm:$0xff]
  %v255 = vld [vmem:[%s2 + $0x38] sm:$0xff]
  %v256 = vld [vmem:[%s2 + $0x40] sm:$0xff]
  %v257 = vld [vmem:[%s2 + $0x48] sm:$0xff]
  %v258 = vld [vmem:[%s2 + $0x50] sm:$0xff]
  %v259 = vld [vmem:[%s2 + $0x58] sm:$0xff]
  %v260 = vadd.f32 %v170, %v218
  %v261 = vadd.f32 %v173, %v221
  %v262 = vadd.f32 %v178, %v226
  %v263 = vadd.f32 %v181, %v229
  %v264 = vadd.f32 %v260, %v248
  %v265 = vadd.f32 %v261, %v249
  %v266 = vadd.f32 %v262, %v250
  %v267 = vadd.f32 %v263, %v251
  %v268 = vxor.u32 %v264, 2147483648
  %v269 = vxor.u32 %v265, 2147483648
  %v270 = vxor.u32 %v266, 2147483648
  %v271 = vxor.u32 %v267, 2147483648
  %v272 = vmul.f32 %v268, 1.442695
  %v273 = vpow.pop %v272
  %v274 = vmul.f32 %v269, 1.442695
  %v275 = vpow.pop %v274
  %v276 = vmul.f32 %v270, 1.442695
  %v277 = vpow.pop %v276
  %v278 = vmul.f32 %v271, 1.442695
  %v279 = vpow.pop %v278
  %v280 = vadd.f32 %v273, 1.0
  %v281 = vadd.f32 %v275, 1.0
  %v282 = vadd.f32 %v277, 1.0
  %v283 = vadd.f32 %v279, 1.0
  %v284 = vrcp.pop %v280
  %v285 = vmul.f32 1.0, %v284
  %v286 = vrcp.pop %v281
  %v287 = vmul.f32 1.0, %v286
  %v288 = vrcp.pop %v282
  %v289 = vmul.f32 1.0, %v288
  %v290 = vrcp.pop %v283
  %v291 = vmul.f32 1.0, %v290
  %v292 = vadd.f32 %v186, %v234
  %v293 = vadd.f32 %v189, %v237
  %v294 = vadd.f32 %v194, %v242
  %v295 = vadd.f32 %v197, %v245
  %v296 = vadd.f32 %v292, %v252
  %v297 = vadd.f32 %v293, %v253
  %v298 = vadd.f32 %v294, %v254
  %v299 = vadd.f32 %v295, %v255
  %v300 = vxor.u32 %v296, 2147483648
  %v301 = vxor.u32 %v297, 2147483648
  %v302 = vxor.u32 %v298, 2147483648
  %v303 = vxor.u32 %v299, 2147483648
  %v304 = vmul.f32 %v300, 1.442695
  %v305 = vpow.pop %v304
  %v306 = vmul.f32 %v301, 1.442695
  %v307 = vpow.pop %v306
  %v308 = vmul.f32 %v302, 1.442695
  %v309 = vpow.pop %v308
  %v310 = vmul.f32 %v303, 1.442695
  %v311 = vpow.pop %v310
  %v312 = vadd.f32 %v305, 1.0
  %v313 = vadd.f32 %v307, 1.0
  %v314 = vadd.f32 %v309, 1.0
  %v315 = vadd.f32 %v311, 1.0
  %v316 = vrcp.pop %v312
  %v317 = vmul.f32 1.0, %v316
  %v318 = vrcp.pop %v313
  %v319 = vmul.f32 1.0, %v318
  %v320 = vrcp.pop %v314
  %v321 = vmul.f32 1.0, %v320
  %v322 = vrcp.pop %v315
  %v323 = vmul.f32 1.0, %v322
  %v324 = vmul.f32 %v317, %v28
  %v325 = vmul.f32 %v319, %v29
  %v326 = vmul.f32 %v321, %v30
  %v327 = vmul.f32 %v323, %v31
  %v328 = vpack.c.bf16 %v325, %v324
  %v329 = vpack.c.bf16 %v327, %v326
  %v330 = vld [vmem:[%s1 + $0x50] sm:$0xf]
  %v331 = vld [vmem:[%s1 + $0x54] sm:$0xf]
  %v332 = vld [vmem:[%s1 + $0x58] sm:$0xf]
  %v333 = vld [vmem:[%s1 + $0x5c] sm:$0xf]
  %v338 = vunpack.c.l.b16 %v330
  %v339 = vunpack.c.l.b16 %v331
  %v340 = vunpack.c.l.b16 %v332
  %v341 = vunpack.c.l.b16 %v333
  %v342 = vpack.c.b16 %v339, %v338
  %v343 = vpack.c.b16 %v341, %v340
  %v345 = vsel %vm104, %v342, 0
  %v348 = vsel %vm104, %v343, 0
  %350 = vmatprep.subr.bf16.mxu0 0
  %351 = vmatpush1.bf16.msra.mxu0 %v328
  %352 = vmatprep.subr.bf16.mxu0 0
  %353 = vmatpush1.bf16.msra.mxu0 %v329
  %354 = vmatprep.subr.bf16.mxu0 0
  %355 = vmatpush1.bf16.msra.mxu0 0
  %356 = vmatprep.subr.bf16.mxu0 0
  %357 = vmatpush1.bf16.msra.mxu0 0
  %358 = vmatprep.subr.bf16.mxu0 0
  %359 = vmatpush1.bf16.msra.mxu0 0
  %360 = vmatprep.subr.bf16.mxu0 0
  %361 = vmatpush1.bf16.msra.mxu0 0
  %362 = vmatprep.subr.bf16.mxu0 0
  %363 = vmatpush1.bf16.msra.mxu0 0
  %364 = vmatprep.subr.bf16.mxu0 0
  %365 = vmatpush1.bf16.msra.mxu0 0
  %366 = vmatprep.subr.bf16.mxu0 0
  %367 = vmatpush1.bf16.msra.mxu0 0
  %368 = vmatprep.subr.bf16.mxu0 0
  %369 = vmatpush1.bf16.msra.mxu0 0
  %370 = vmatprep.subr.bf16.mxu0 0
  %371 = vmatpush1.bf16.msra.mxu0 0
  %372 = vmatprep.subr.bf16.mxu0 0
  %373 = vmatpush1.bf16.msra.mxu0 0
  %374 = vmatprep.subr.bf16.mxu0 0
  %375 = vmatpush1.bf16.msra.mxu0 0
  %376 = vmatprep.subr.bf16.mxu0 0
  %377 = vmatpush1.bf16.msra.mxu0 0
  %378 = vmatprep.subr.bf16.mxu0 0
  %379 = vmatpush1.bf16.msra.mxu0 0
  %380 = vmatprep.subr.bf16.mxu0 0
  %381 = vmatpush1.bf16.msra.mxu0 0
  %382 = vmatprep.mubr.bf16.mxu0 0
  %383 = vmatmul.mubr.bf16.gmra.mrb[0].mxu0 %v345
  %v384 = vpop.f32.mrb[0].mxu0
  %v385 = vadd.f32 0.0, %v384
  %v386 = vpop.f32.mrb[0].mxu0
  %v387 = vpop.f32.mrb[0].mxu0
  %v388 = vadd.f32 0.0, %v387
  %v389 = vpop.f32.mrb[0].mxu0
  %390 = vmatprep.mubr.bf16.mxu0 0
  %391 = vmatmul.mubr.bf16.gmra.mrb[0].mxu0 %v348
  %v392 = vpop.f32.mrb[0].mxu0
  %v393 = vadd.f32 0.0, %v392
  %v394 = vpop.f32.mrb[0].mxu0
  %v395 = vpop.f32.mrb[0].mxu0
  %v396 = vadd.f32 0.0, %v395
  %v397 = vpop.f32.mrb[0].mxu0
  %398 = vdwg.mxu0
  %v399 = vadd.f32 %v202, %v385
  %v400 = vadd.f32 %v205, %v388
  %v401 = vadd.f32 %v210, %v393
  %v402 = vadd.f32 %v213, %v396
  %v403 = vadd.f32 %v399, %v256
  %v404 = vadd.f32 %v400, %v257
  %v405 = vadd.f32 %v401, %v258
  %v406 = vadd.f32 %v402, %v259
  %v407 = vtanh.pop %v403
  %v408 = vtanh.pop %v404
  %v409 = vtanh.pop %v405
  %v410 = vtanh.pop %v406
  %v411 = vsub.f32 1.0, %v285
  %v412 = vsub.f32 1.0, %v287
  %v413 = vsub.f32 1.0, %v289
  %v414 = vsub.f32 1.0, %v291
  %v415 = vmul.f32 %v411, %v28
  %v416 = vmul.f32 %v412, %v29
  %v417 = vmul.f32 %v413, %v30
  %v418 = vmul.f32 %v414, %v31
  %v419 = vmul.f32 %v285, %v407
  %v420 = vmul.f32 %v287, %v408
  %v421 = vmul.f32 %v289, %v409
  %v422 = vmul.f32 %v291, %v410
  %v423 = vadd.f32 %v415, %v419
  %v424 = vadd.f32 %v416, %v420
  %v425 = vadd.f32 %v417, %v421
  %v426 = vadd.f32 %v418, %v422
  %vm427 = vcmask 130048
  %428 = vst.msk [vmem:[#allocation2] sm:$0xff] %vm427, %v423
  %429 = vst.msk [vmem:[#allocation2 + $0x8] sm:$0xff] %vm427, %v424
  %430 = vst.msk [vmem:[#allocation2 + $0x10] sm:$0xff] %vm427, %v425
  %431 = vst.msk [vmem:[#allocation2 + $0x18] sm:$0xff] %vm427, %v426
  // Predicated region
  $region18: #{tpu_custom_call.1} parent=0 // pred_check
    %p432 = pneg %p15
  $region19: #{tpu_custom_call.1} parent=0 // pred_check_branch
    %434 = sbr.rel (%p432) target = $region21
  $region20: #{tpu_custom_call.1} parent=0 // pred_region
    %435 = vst.msk [vmem:[%s3] sm:$0xff] %vm427, %v423
    %436 = vst.msk [vmem:[%s3 + $0x8] sm:$0xff] %vm427, %v424
    %437 = vst.msk [vmem:[%s3 + $0x10] sm:$0xff] %vm427, %v425
    %438 = vst.msk [vmem:[%s3 + $0x18] sm:$0xff] %vm427, %v426
  $region21: #{tpu_custom_call.1} parent=0 // pred_fallthru
    _
  // Predicated region
  $region22: #{tpu_custom_call.1} parent=0 // pred_check
    _
  $region23: #{tpu_custom_call.1} parent=0 // pred_check_branch
    %440 = sbr.rel (0) target = $region25
  $region24: #{tpu_custom_call.1} parent=0 // pred_region
    _
  $region25: #{tpu_custom_call.1} parent=0 // pred_fallthru
    _
  // Predicated region
  $region26: #{tpu_custom_call.1} parent=0 // pred_check
    _
  $region27: #{tpu_custom_call.1} parent=0 // pred_check_branch
    %442 = sbr.rel (0) target = $region29
  $region28: #{tpu_custom_call.1} parent=0 // pred_region
    _
  $region29: #{tpu_custom_call.1} parent=0 // pred_fallthru
    _

</llo_original>
